<compile_context>
chip_gen: v5e
topology: v5e:2x2
jax: 0.10.0
libtpu: 0.0.40
codegen_flags: <defaults>
</compile_context>

<pallas_src>
import functools

import jax
import jax.numpy as jnp
from jax import lax
from jax.experimental import pallas as pl
from jax.experimental.pallas import tpu as pltpu

_SUBLANE = 8


def _round_up(x, m):
    return ((x + m - 1) // m) * m


def _choose_tile(b):
    """Pick (padded batch, positive-column tile) keeping the (Tb, B, B) slab small."""
    b8 = _round_up(max(b, 1), _SUBLANE)
    budget = 12 * 1024 * 1024                      # bytes for the 3-D intermediates
    per_row = 3 * b8 * b8 * 4                      # ~3 live f32 copies of one (1,B,B) row
    cap = max(1, budget // per_row)
    tb = _SUBLANE
    while tb * 2 <= min(cap, b8, 512):
        tb *= 2
    bpad = _round_up(b8, tb)
    return bpad, tb


def _triplet_kernel(labels_col_ref, labels_row_ref, emb_ref, loss_ref,
                    pdist_sc, shifted_sc, rowmax_sc, negmax_sc, neginside_sc, acc_sc,
                    *, margin, b_real, tile_b):
    j = pl.program_id(0)
    bp = pdist_sc.shape[0]

    # ---------------- one-time precompute (grid step 0) ----------------
    @pl.when(j == 0)
    def _precompute():
        emb = emb_ref[...].astype(jnp.float32)                       # (Bp, D)
        sq = jnp.sum(emb * emb, axis=-1, keepdims=True)              # (Bp, 1)
        gram = lax.dot_general(emb, emb, (((1,), (1,)), ((), ())),
                               preferred_element_type=jnp.float32)   # (Bp, Bp)
        psq = jnp.maximum(sq + sq.T - 2.0 * gram, 0.0)
        row_i = lax.broadcasted_iota(jnp.int32, (bp, bp), 0)
        col_i = lax.broadcasted_iota(jnp.int32, (bp, bp), 1)
        pdist = jnp.where(row_i == col_i, 0.0, psq)                  # symmetric, diag 0
        pdist_sc[...] = pdist

        adj_not = labels_col_ref[...] != labels_row_ref[...]         # (Bp, Bp), symmetric

        # Per-anchor stats with anchors on the lane axis (reduce over axis 0 == candidate
        # index k; valid because pdist / adj_not are symmetric).  Results are (1, Bp).
        neg_mask_ka = adj_not & (row_i < b_real)                     # k is a usable negative of a
        row_max = jnp.max(pdist, axis=0, keepdims=True)
        row_min = jnp.min(pdist, axis=0, keepdims=True)
        rowmax_sc[...] = row_max
        negmax_sc[...] = jnp.max(jnp.where(neg_mask_ka, pdist, 0.0),
                                 axis=0, keepdims=True)
        neginside_sc[...] = (jnp.max(jnp.where(neg_mask_ka, pdist - row_min, 0.0),
                                     axis=0, keepdims=True) + row_min)

        # shifted_sc[a, k] = pdist[a,k] - rowmax[a] if k is a usable negative of a, else 0.
        adj_not_eff = adj_not & (col_i < b_real)
        row_max_c = jnp.max(pdist, axis=1, keepdims=True)            # (Bp, 1)
        shifted_sc[...] = jnp.where(adj_not_eff, pdist - row_max_c, 0.0)

        acc_sc[0] = 0.0                                              # loss numerator
        acc_sc[1] = 0.0                                              # num_positives

    # ---------------- per-step: one tile of `tile_b` positive columns ----------------
    # Layout: tile row = positive index b (global b0+b), lane column = anchor index a.
    b0 = pl.multiple_of(j * tile_b, tile_b)
    p_t = pdist_sc[pl.ds(b0, tile_b), :]                             # (Tb, Bp) = pdist[a, b0+b]

    # negatives_outside[a, b0+b] = min over semi-hard negatives k of pdist[a, k]
    greater = pdist_sc[...][None, :, :] > p_t[:, :, None]            # (Tb, Bp, Bp) bool
    sel = jnp.where(greater, shifted_sc[...][None, :, :], 0.0)       # (Tb, Bp, Bp) f32
    neg_out = jnp.min(sel, axis=-1) + rowmax_sc[...]                 # (Tb, Bp)

    # mask_final in O(B^2): semi-hard negative exists iff max negative dist > pdist[a,b].
    mask_final = negmax_sc[...] > p_t                                # (Tb, Bp) bool
    semi_hard = jnp.where(mask_final, neg_out, neginside_sc[...])
    loss_mat = margin + p_t - semi_hard                              # (Tb, Bp)

    lbl_t = labels_col_ref[pl.ds(b0, tile_b), :]                     # (Tb, 1)
    adjacency_t = lbl_t == labels_row_ref[...]                       # (Tb, Bp)
    g_pos = lax.broadcasted_iota(jnp.int32, (tile_b, bp), 0) + b0
    g_anc = lax.broadcasted_iota(jnp.int32, (tile_b, bp), 1)
    mask_pos = (adjacency_t & (g_pos != g_anc)
                & (g_pos < b_real) & (g_anc < b_real))               # padded rows/cols excluded

    acc_sc[0] = acc_sc[0] + jnp.sum(jnp.where(mask_pos, jnp.maximum(loss_mat, 0.0), 0.0))
    acc_sc[1] = acc_sc[1] + jnp.sum(jnp.where(mask_pos, 1.0, 0.0))

    @pl.when(j == pl.num_programs(0) - 1)
    def _finalize():
        # NOTE: NaN when no positive pair exists — identical to the torch reference.
        loss_ref[0, 0] = acc_sc[0] / acc_sc[1]


def triplet_semi_hard_loss(labels, embeddings, margin=1.0):
    """Pallas equivalent of TripletLoss(device).forward(target=labels, input=embeddings)."""
    B, D = embeddings.shape
    bpad, tile_b = _choose_tile(B)
    pad = bpad - B

    emb = embeddings.astype(jnp.float32)
    lbl = labels.reshape(B).astype(jnp.int32)
    if pad:
        emb = jnp.pad(emb, ((0, pad), (0, 0)))
        lbl = jnp.pad(lbl, (0, pad))            # pad label value irrelevant (index-masked)
    labels_col = lbl.reshape(bpad, 1)
    labels_row = lbl.reshape(1, bpad)

    n_tiles = bpad // tile_b
    grid_spec = pltpu.PrefetchScalarGridSpec(
        num_scalar_prefetch=0,
        grid=(n_tiles,),
        in_specs=[
            pl.BlockSpec((bpad, 1), lambda j: (0, 0)),     # labels, column layout
            pl.BlockSpec((1, bpad), lambda j: (0, 0)),     # labels, lane-dense row layout
            pl.BlockSpec((bpad, D), lambda j: (0, 0)),     # embeddings
        ],
        out_specs=pl.BlockSpec(memory_space=pltpu.SMEM),
        scratch_shapes=[
            pltpu.VMEM((bpad, bpad), jnp.float32),         # pdist
            pltpu.VMEM((bpad, bpad), jnp.float32),         # negative-masked, rowmax-shifted pdist
            pltpu.VMEM((1, bpad), jnp.float32),            # per-anchor row max
            pltpu.VMEM((1, bpad), jnp.float32),            # per-anchor max negative distance
            pltpu.VMEM((1, bpad), jnp.float32),            # per-anchor negatives_inside
            pltpu.SMEM((2,), jnp.float32),                 # [loss numerator, num_positives]
        ],
    )
    cost = pl.CostEstimate(
        flops=2 * bpad * bpad * D + 8 * bpad * bpad * bpad,
        transcendentals=0,
        bytes_accessed=4 * (bpad * D + 2 * bpad + 1),
    )
    out = pl.pallas_call(
        functools.partial(_triplet_kernel, margin=float(margin), b_real=B, tile_b=tile_b),
        out_shape=jax.ShapeDtypeStruct((1, 1), jnp.float32),
        grid_spec=grid_spec,
        compiler_params=pltpu.CompilerParams(
            dimension_semantics=("arbitrary",),
            vmem_limit_bytes=32 * 1024 * 1024,
        ),
        cost_estimate=cost,
    )(labels_col, labels_row, emb)
    # TODO(synk): for B beyond ~512 the full (B,B) pdist scratch + minimum (8,B,B) slab
    # outgrow VMEM; would need a second-level tiling over the candidate (k) axis.
    return out[0, 0].astype(embeddings.dtype)


def _reference_loss(labels, embeddings, margin=1.0):
    """Pure-JAX transcription of the torch code (tile/reshape formulation)."""
    emb = embeddings.astype(jnp.float32)
    B = emb.shape[0]
    c1 = jnp.sum(emb ** 2, axis=-1).reshape(B, 1)
    c2 = c1.reshape(1, B)
    c3 = emb @ emb.T
    psq = jnp.maximum(c1 + c2 - 2.0 * c3, 0.0)
    pdist = psq * (1.0 - jnp.eye(B, dtype=jnp.float32))
    lbl = labels.reshape(B, 1)
    adjacency = lbl == lbl.T
    adjacency_not = ~adjacency
    pdist_tile = jnp.tile(pdist, (B, 1))
    adj_not_tile = jnp.tile(adjacency_not, (B, 1))
    transpose_reshape = pdist.T.reshape(-1, 1)
    mask = adj_not_tile & (pdist_tile > transpose_reshape)
    mask_f = mask.astype(jnp.float32)
    mask_final = (jnp.sum(mask_f, axis=1) > 0.0).reshape(B, B).T
    axis_max = jnp.max(pdist_tile, axis=1, keepdims=True)
    masked_min = jnp.min((pdist_tile - axis_max) * mask_f, axis=1, keepdims=True) + axis_max
    negatives_outside = masked_min.reshape(B, B).T
    axis_min = jnp.min(pdist, axis=1, keepdims=True)
    masked_max = (jnp.max((pdist - axis_min) * adjacency_not.astype(jnp.float32),
                          axis=1, keepdims=True) + axis_min)
    negatives_inside = jnp.tile(masked_max, (1, B))
    semi_hard = jnp.where(mask_final, negatives_outside, negatives_inside)
    loss_mat = margin + pdist - semi_hard
    mask_pos = adjacency.astype(jnp.float32) - jnp.eye(B, dtype=jnp.float32)
    num_pos = jnp.sum(mask_pos)
    return (jnp.sum(jnp.maximum(loss_mat * mask_pos, 0.0)) / num_pos).astype(embeddings.dtype)


if __name__ == "__main__":
    key = jax.random.PRNGKey(0)
    k1, k2 = jax.random.split(key)

    # Case 1: B multiple of the tile (no padding path), deterministic labels with positives.
    B, D = 8, 32
    labels = jnp.array([0, 0, 1, 1, 2, 2, 3, 3], dtype=jnp.int32)
    emb = jax.random.normal(k1, (B, D), dtype=jnp.float32)
    emb = emb / jnp.linalg.norm(emb, axis=-1, keepdims=True)      # l2-normalized, as expected
    loss = jax.block_until_ready(triplet_semi_hard_loss(labels, emb))
    ref = _reference_loss(labels, emb)
    assert jnp.allclose(loss, ref, atol=1e-5, rtol=1e-5), (loss, ref)

    # Case 2: exercises the padding / validity-mask path (B not a multiple of the tile).
    B2 = 6
    labels2 = jnp.array([0, 0, 1, 1, 2, 2], dtype=jnp.int32)
    emb2 = jax.random.normal(k2, (B2, D), dtype=jnp.float32)
    emb2 = emb2 / jnp.linalg.norm(emb2, axis=-1, keepdims=True)
    loss2 = jax.block_until_ready(triplet_semi_hard_loss(labels2, emb2))
    ref2 = _reference_loss(labels2, emb2)
    assert jnp.allclose(loss2, ref2, atol=1e-5, rtol=1e-5), (loss2, ref2)

    print("KERNEL_OK")
</pallas_src>

<mosaic_0001>
module attributes {stable_mosaic.version = 11 : i64} {
  func.func @_triplet_kernel(%arg0: i32, %arg1: memref<8x1xi32, #tpu.memory_space<vmem>>, %arg2: memref<1x8xi32, #tpu.memory_space<vmem>>, %arg3: memref<8x32xf32, #tpu.memory_space<vmem>>, %arg4: memref<1x1xf32, #tpu.memory_space<smem>>, %arg5: memref<8x8xf32, #tpu.memory_space<vmem>>, %arg6: memref<8x8xf32, #tpu.memory_space<vmem>>, %arg7: memref<1x8xf32, #tpu.memory_space<vmem>>, %arg8: memref<1x8xf32, #tpu.memory_space<vmem>>, %arg9: memref<1x8xf32, #tpu.memory_space<vmem>>, %arg10: memref<2xf32, #tpu.memory_space<smem>>) attributes {dimension_semantics = [#tpu.dimension_semantics<arbitrary>], iteration_bounds = array<i64: 1>, scalar_prefetch = 0 : i64, scratch_operands = 6 : i64, tpu.core_type = #tpu.core_type<tc>, window_params = [{pipeline_mode = #tpu.pipeline_mode<synchronous>, transform_indices = @transform_0, window_bounds = array<i64: 8, 1>}, {pipeline_mode = #tpu.pipeline_mode<synchronous>, transform_indices = @transform_1, window_bounds = array<i64: 1, 8>}, {pipeline_mode = #tpu.pipeline_mode<synchronous>, transform_indices = @transform_2, window_bounds = array<i64: 8, 32>}, {transform_indices = @transform_3, window_bounds = array<i64: 1, 1>}]} {
    %c0_i32 = arith.constant 0 : i32
    %0 = arith.cmpi eq, %arg0, %c0_i32 : i32
    %1 = arith.extui %0 : i1 to i32
    %c0_i32_0 = arith.constant 0 : i32
    %2 = arith.cmpi ne, %1, %c0_i32_0 : i32
    scf.if %2 {
      %c0_29 = arith.constant 0 : index
      %c0_30 = arith.constant 0 : index
      %75 = vector.load %arg3[%c0_29, %c0_30] : memref<8x32xf32, #tpu.memory_space<vmem>>, vector<8x32xf32>
      %76 = arith.mulf %75, %75 : vector<8x32xf32>
      %cst_31 = arith.constant dense<0.000000e+00> : vector<8xf32>
      %77 = vector.multi_reduction <add>, %76, %cst_31 [1] : vector<8x32xf32> to vector<8xf32>
      %78 = vector.shape_cast %77 : vector<8xf32> to vector<8x1xf32>
      %cst_32 = arith.constant dense<0.000000e+00> : vector<8x8xf32>
      %79 = tpu.matmul %75, %75, %cst_32 {dimension_numbers = #tpu.dot_dimension_numbers<[1], [1], [0], [0], [0, 0, 1, 0], [], []>} : vector<8x32xf32>, vector<8x32xf32>, vector<8x8xf32> -> vector<8x8xf32>
      %80 = tpu.transpose %78, [1, 0] : vector<8x1xf32> -> vector<1x8xf32>
      %81 = vector.broadcast %78 : vector<8x1xf32> to vector<8x8xf32>
      %82 = vector.broadcast %80 : vector<1x8xf32> to vector<8x8xf32>
      %83 = arith.addf %81, %82 : vector<8x8xf32>
      %cst_33 = arith.constant 2.000000e+00 : f32
      %84 = vector.broadcast %cst_33 : f32 to vector<8x8xf32>
      %85 = arith.mulf %84, %79 : vector<8x8xf32>
      %86 = arith.subf %83, %85 : vector<8x8xf32>
      %cst_34 = arith.constant 0.000000e+00 : f32
      %87 = vector.broadcast %cst_34 : f32 to vector<8x8xf32>
      %88 = arith.maximumf %86, %87 : vector<8x8xf32>
      %89 = tpu.iota {dimensions = array<i32: 0>} : vector<8x8xi32>
      %90 = tpu.iota {dimensions = array<i32: 1>} : vector<8x8xi32>
      %91 = arith.cmpi eq, %89, %90 : vector<8x8xi32>
      %cst_35 = arith.constant 0.000000e+00 : f32
      %92 = vector.broadcast %cst_35 : f32 to vector<8x8xf32>
      %93 = arith.select %91, %92, %88 : vector<8x8xi1>, vector<8x8xf32>
      %c0_36 = arith.constant 0 : index
      %c0_37 = arith.constant 0 : index
      %94 = vector.load %arg5[%c0_36, %c0_37] : memref<8x8xf32, #tpu.memory_space<vmem>>, vector<8x8xf32>
      tpu.vector_store %arg5[%c0_36, %c0_37], %93 {strides = array<i32>} : memref<8x8xf32, #tpu.memory_space<vmem>>, vector<8x8xf32>,
      %c0_38 = arith.constant 0 : index
      %c0_39 = arith.constant 0 : index
      %95 = vector.load %arg1[%c0_38, %c0_39] : memref<8x1xi32, #tpu.memory_space<vmem>>, vector<8x1xi32>
      %c0_40 = arith.constant 0 : index
      %c0_41 = arith.constant 0 : index
      %96 = vector.load %arg2[%c0_40, %c0_41] : memref<1x8xi32, #tpu.memory_space<vmem>>, vector<1x8xi32>
      %97 = vector.broadcast %95 : vector<8x1xi32> to vector<8x8xi32>
      %98 = vector.broadcast %96 : vector<1x8xi32> to vector<8x8xi32>
      %99 = arith.cmpi ne, %97, %98 : vector<8x8xi32>
      %c8_i32_42 = arith.constant 8 : i32
      %100 = vector.broadcast %c8_i32_42 : i32 to vector<8x8xi32>
      %101 = arith.cmpi slt, %89, %100 : vector<8x8xi32>
      %102 = arith.andi %99, %101 : vector<8x8xi1>
      %cst_43 = arith.constant dense<0xFF800000> : vector<8xf32>
      %103 = vector.multi_reduction <maximumf>, %93, %cst_43 [0] : vector<8x8xf32> to vector<8xf32>
      %104 = vector.shape_cast %103 : vector<8xf32> to vector<1x8xf32>
      %cst_44 = arith.constant dense<0x7F800000> : vector<8xf32>
      %105 = vector.multi_reduction <minimumf>, %93, %cst_44 [0] : vector<8x8xf32> to vector<8xf32>
      %106 = vector.shape_cast %105 : vector<8xf32> to vector<1x8xf32>
      %c0_45 = arith.constant 0 : index
      %c0_46 = arith.constant 0 : index
      %107 = vector.load %arg7[%c0_45, %c0_46] : memref<1x8xf32, #tpu.memory_space<vmem>>, vector<1x8xf32>
      tpu.vector_store %arg7[%c0_45, %c0_46], %104 {strides = array<i32>} : memref<1x8xf32, #tpu.memory_space<vmem>>, vector<1x8xf32>,
      %cst_47 = arith.constant 0.000000e+00 : f32
      %108 = vector.broadcast %cst_47 : f32 to vector<8x8xf32>
      %109 = arith.select %102, %93, %108 : vector<8x8xi1>, vector<8x8xf32>
      %cst_48 = arith.constant dense<0xFF800000> : vector<8xf32>
      %110 = vector.multi_reduction <maximumf>, %109, %cst_48 [0] : vector<8x8xf32> to vector<8xf32>
      %111 = vector.shape_cast %110 : vector<8xf32> to vector<1x8xf32>
      %c0_49 = arith.constant 0 : index
      %c0_50 = arith.constant 0 : index
      %112 = vector.load %arg8[%c0_49, %c0_50] : memref<1x8xf32, #tpu.memory_space<vmem>>, vector<1x8xf32>
      tpu.vector_store %arg8[%c0_49, %c0_50], %111 {strides = array<i32>} : memref<1x8xf32, #tpu.memory_space<vmem>>, vector<1x8xf32>,
      %113 = vector.broadcast %106 : vector<1x8xf32> to vector<8x8xf32>
      %114 = arith.subf %93, %113 : vector<8x8xf32>
      %cst_51 = arith.constant 0.000000e+00 : f32
      %115 = vector.broadcast %cst_51 : f32 to vector<8x8xf32>
      %116 = arith.select %102, %114, %115 : vector<8x8xi1>, vector<8x8xf32>
      %cst_52 = arith.constant dense<0xFF800000> : vector<8xf32>
      %117 = vector.multi_reduction <maximumf>, %116, %cst_52 [0] : vector<8x8xf32> to vector<8xf32>
      %118 = vector.shape_cast %117 : vector<8xf32> to vector<1x8xf32>
      %119 = arith.addf %118, %106 : vector<1x8xf32>
      %c0_53 = arith.constant 0 : index
      %c0_54 = arith.constant 0 : index
      %120 = vector.load %arg9[%c0_53, %c0_54] : memref<1x8xf32, #tpu.memory_space<vmem>>, vector<1x8xf32>
      tpu.vector_store %arg9[%c0_53, %c0_54], %119 {strides = array<i32>} : memref<1x8xf32, #tpu.memory_space<vmem>>, vector<1x8xf32>,
      %c8_i32_55 = arith.constant 8 : i32
      %121 = vector.broadcast %c8_i32_55 : i32 to vector<8x8xi32>
      %122 = arith.cmpi slt, %90, %121 : vector<8x8xi32>
      %123 = arith.andi %99, %122 : vector<8x8xi1>
      %cst_56 = arith.constant dense<0xFF800000> : vector<8xf32>
      %124 = vector.multi_reduction <maximumf>, %93, %cst_56 [1] : vector<8x8xf32> to vector<8xf32>
      %125 = vector.shape_cast %124 : vector<8xf32> to vector<8x1xf32>
      %126 = vector.broadcast %125 : vector<8x1xf32> to vector<8x8xf32>
      %127 = arith.subf %93, %126 : vector<8x8xf32>
      %cst_57 = arith.constant 0.000000e+00 : f32
      %128 = vector.broadcast %cst_57 : f32 to vector<8x8xf32>
      %129 = arith.select %123, %127, %128 : vector<8x8xi1>, vector<8x8xf32>
      %c0_58 = arith.constant 0 : index
      %c0_59 = arith.constant 0 : index
      %130 = vector.load %arg6[%c0_58, %c0_59] : memref<8x8xf32, #tpu.memory_space<vmem>>, vector<8x8xf32>
      tpu.vector_store %arg6[%c0_58, %c0_59], %129 {strides = array<i32>} : memref<8x8xf32, #tpu.memory_space<vmem>>, vector<8x8xf32>,
      %cst_60 = arith.constant 0.000000e+00 : f32
      %c0_61 = arith.constant 0 : index
      %131 = memref.load %arg10[%c0_61] : memref<2xf32, #tpu.memory_space<smem>>
      memref.store %cst_60, %arg10[%c0_61] : memref<2xf32, #tpu.memory_space<smem>>
      %cst_62 = arith.constant 0.000000e+00 : f32
      %c1_63 = arith.constant 1 : index
      %132 = memref.load %arg10[%c1_63] : memref<2xf32, #tpu.memory_space<smem>>
      memref.store %cst_62, %arg10[%c1_63] : memref<2xf32, #tpu.memory_space<smem>>
    } else {
    }
    %c8_i32 = arith.constant 8 : i32
    %3 = arith.muli %arg0, %c8_i32 : i32
    %4 = tpu.assume_multiple %3, 8 : i32
    %5 = arith.index_cast %4 : i32 to index
    %c0 = arith.constant 0 : index
    %6 = vector.load %arg5[%5, %c0] : memref<8x8xf32, #tpu.memory_space<vmem>>, vector<8x8xf32>
    %c0_1 = arith.constant 0 : index
    %c0_2 = arith.constant 0 : index
    %7 = vector.load %arg5[%c0_1, %c0_2] : memref<8x8xf32, #tpu.memory_space<vmem>>, vector<8x8xf32>
    %8 = vector.shape_cast %7 : vector<8x8xf32> to vector<1x8x8xf32>
    %9 = vector.shape_cast %6 : vector<8x8xf32> to vector<8x8x1xf32>
    %10 = vector.broadcast %8 : vector<1x8x8xf32> to vector<8x8x8xf32>
    %11 = vector.broadcast %9 : vector<8x8x1xf32> to vector<8x8x8xf32>
    %12 = arith.cmpf ogt, %10, %11 : vector<8x8x8xf32>
    %c0_3 = arith.constant 0 : index
    %c0_4 = arith.constant 0 : index
    %13 = vector.load %arg6[%c0_3, %c0_4] : memref<8x8xf32, #tpu.memory_space<vmem>>, vector<8x8xf32>
    %14 = vector.shape_cast %13 : vector<8x8xf32> to vector<1x8x8xf32>
    %cst = arith.constant 0.000000e+00 : f32
    %15 = vector.shape_cast %14 : vector<1x8x8xf32> to vector<1x8x8xf32>
    %16 = vector.broadcast %15 : vector<1x8x8xf32> to vector<8x8x8xf32>
    %17 = vector.broadcast %cst : f32 to vector<8x8x8xf32>
    %18 = arith.select %12, %16, %17 : vector<8x8x8xi1>, vector<8x8x8xf32>
    %cst_5 = arith.constant dense<0x7F800000> : vector<8x8xf32>
    %19 = vector.multi_reduction <minimumf>, %18, %cst_5 [2] : vector<8x8x8xf32> to vector<8x8xf32>
    %c0_6 = arith.constant 0 : index
    %c0_7 = arith.constant 0 : index
    %20 = vector.load %arg7[%c0_6, %c0_7] : memref<1x8xf32, #tpu.memory_space<vmem>>, vector<1x8xf32>
    %21 = vector.broadcast %20 : vector<1x8xf32> to vector<8x8xf32>
    %22 = arith.addf %19, %21 : vector<8x8xf32>
    %c0_8 = arith.constant 0 : index
    %c0_9 = arith.constant 0 : index
    %23 = vector.load %arg8[%c0_8, %c0_9] : memref<1x8xf32, #tpu.memory_space<vmem>>, vector<1x8xf32>
    %24 = vector.broadcast %23 : vector<1x8xf32> to vector<8x8xf32>
    %25 = arith.cmpf ogt, %24, %6 : vector<8x8xf32>
    %c0_10 = arith.constant 0 : index
    %c0_11 = arith.constant 0 : index
    %26 = vector.load %arg9[%c0_10, %c0_11] : memref<1x8xf32, #tpu.memory_space<vmem>>, vector<1x8xf32>
    %27 = vector.shape_cast %26 : vector<1x8xf32> to vector<1x8xf32>
    %28 = vector.broadcast %27 : vector<1x8xf32> to vector<8x8xf32>
    %29 = arith.select %25, %22, %28 : vector<8x8xi1>, vector<8x8xf32>
    %cst_12 = arith.constant 1.000000e+00 : f32
    %30 = vector.broadcast %cst_12 : f32 to vector<8x8xf32>
    %31 = arith.addf %30, %6 : vector<8x8xf32>
    %32 = arith.subf %31, %29 : vector<8x8xf32>
    %33 = arith.index_cast %4 : i32 to index
    %c0_13 = arith.constant 0 : index
    %34 = vector.load %arg1[%33, %c0_13] : memref<8x1xi32, #tpu.memory_space<vmem>>, vector<8x1xi32>
    %c0_14 = arith.constant 0 : index
    %c0_15 = arith.constant 0 : index
    %35 = vector.load %arg2[%c0_14, %c0_15] : memref<1x8xi32, #tpu.memory_space<vmem>>, vector<1x8xi32>
    %36 = vector.broadcast %34 : vector<8x1xi32> to vector<8x8xi32>
    %37 = vector.broadcast %35 : vector<1x8xi32> to vector<8x8xi32>
    %38 = arith.cmpi eq, %36, %37 : vector<8x8xi32>
    %39 = tpu.iota {dimensions = array<i32: 0>} : vector<8x8xi32>
    %40 = vector.broadcast %4 : i32 to vector<8x8xi32>
    %41 = arith.addi %39, %40 : vector<8x8xi32>
    %42 = tpu.iota {dimensions = array<i32: 1>} : vector<8x8xi32>
    %43 = arith.cmpi ne, %41, %42 : vector<8x8xi32>
    %44 = arith.andi %38, %43 : vector<8x8xi1>
    %c8_i32_16 = arith.constant 8 : i32
    %45 = vector.broadcast %c8_i32_16 : i32 to vector<8x8xi32>
    %46 = arith.cmpi slt, %41, %45 : vector<8x8xi32>
    %47 = arith.andi %44, %46 : vector<8x8xi1>
    %c8_i32_17 = arith.constant 8 : i32
    %48 = vector.broadcast %c8_i32_17 : i32 to vector<8x8xi32>
    %49 = arith.cmpi slt, %42, %48 : vector<8x8xi32>
    %50 = arith.andi %47, %49 : vector<8x8xi1>
    %c0_18 = arith.constant 0 : index
    %51 = memref.load %arg10[%c0_18] : memref<2xf32, #tpu.memory_space<smem>>
    %cst_19 = arith.constant 0.000000e+00 : f32
    %52 = vector.broadcast %cst_19 : f32 to vector<8x8xf32>
    %53 = arith.maximumf %32, %52 : vector<8x8xf32>
    %cst_20 = arith.constant 0.000000e+00 : f32
    %54 = vector.broadcast %cst_20 : f32 to vector<8x8xf32>
    %55 = arith.select %50, %53, %54 : vector<8x8xi1>, vector<8x8xf32>
    %56 = vector.shape_cast %55 : vector<8x8xf32> to vector<1x8x8xf32>
    %cst_21 = arith.constant dense<0.000000e+00> : vector<1xf32>
    %57 = vector.multi_reduction <add>, %56, %cst_21 [1, 2] : vector<1x8x8xf32> to vector<1xf32>
    %58 = vector.shape_cast %57 : vector<1xf32> to vector<1x1x1xf32>
    %59 = vector.extract %58[0, 0, 0] : f32 from vector<1x1x1xf32>
    %60 = arith.addf %51, %59 : f32
    %c0_22 = arith.constant 0 : index
    %61 = memref.load %arg10[%c0_22] : memref<2xf32, #tpu.memory_space<smem>>
    memref.store %60, %arg10[%c0_22] : memref<2xf32, #tpu.memory_space<smem>>
    %c1 = arith.constant 1 : index
    %62 = memref.load %arg10[%c1] : memref<2xf32, #tpu.memory_space<smem>>
    %cst_23 = arith.constant 1.000000e+00 : f32
    %cst_24 = arith.constant 0.000000e+00 : f32
    %63 = vector.broadcast %cst_23 : f32 to vector<8x8xf32>
    %64 = vector.broadcast %cst_24 : f32 to vector<8x8xf32>
    %65 = arith.select %50, %63, %64 : vector<8x8xi1>, vector<8x8xf32>
    %66 = vector.shape_cast %65 : vector<8x8xf32> to vector<1x8x8xf32>
    %cst_25 = arith.constant dense<0.000000e+00> : vector<1xf32>
    %67 = vector.multi_reduction <add>, %66, %cst_25 [1, 2] : vector<1x8x8xf32> to vector<1xf32>
    %68 = vector.shape_cast %67 : vector<1xf32> to vector<1x1x1xf32>
    %69 = vector.extract %68[0, 0, 0] : f32 from vector<1x1x1xf32>
    %70 = arith.addf %62, %69 : f32
    %c1_26 = arith.constant 1 : index
    %71 = memref.load %arg10[%c1_26] : memref<2xf32, #tpu.memory_space<smem>>
    memref.store %70, %arg10[%c1_26] : memref<2xf32, #tpu.memory_space<smem>>
    %c0_i32_27 = arith.constant 0 : i32
    %72 = arith.cmpi eq, %arg0, %c0_i32_27 : i32
    %73 = arith.extui %72 : i1 to i32
    %c0_i32_28 = arith.constant 0 : i32
    %74 = arith.cmpi ne, %73, %c0_i32_28 : i32
    scf.if %74 {
      %c0_29 = arith.constant 0 : index
      %75 = memref.load %arg10[%c0_29] : memref<2xf32, #tpu.memory_space<smem>>
      %c1_30 = arith.constant 1 : index
      %76 = memref.load %arg10[%c1_30] : memref<2xf32, #tpu.memory_space<smem>>
      %77 = arith.divf %75, %76 : f32
      %c0_31 = arith.constant 0 : index
      %c0_32 = arith.constant 0 : index
      %78 = memref.load %arg4[%c0_31, %c0_32] : memref<1x1xf32, #tpu.memory_space<smem>>
      memref.store %77, %arg4[%c0_31, %c0_32] : memref<1x1xf32, #tpu.memory_space<smem>>
    } else {
    }
    return
  }
  func.func @transform_0(%arg0: i32) -> (i32, i32) {
    %c0_i32 = arith.constant 0 : i32
    %c0_i32_0 = arith.constant 0 : i32
    %c0_i32_1 = arith.constant 0 : i32
    return %c0_i32, %c0_i32_0 : i32, i32
  }
  func.func @transform_1(%arg0: i32) -> (i32, i32) {
    %c0_i32 = arith.constant 0 : i32
    %c0_i32_0 = arith.constant 0 : i32
    %c0_i32_1 = arith.constant 0 : i32
    return %c0_i32, %c0_i32_0 : i32, i32
  }
  func.func @transform_2(%arg0: i32) -> (i32, i32) {
    %c0_i32 = arith.constant 0 : i32
    %c0_i32_0 = arith.constant 0 : i32
    %c0_i32_1 = arith.constant 0 : i32
    return %c0_i32, %c0_i32_0 : i32, i32
  }
  func.func @transform_3(%arg0: i32) -> (i32, i32) {
    %c0_i32 = arith.constant 0 : i32
    %c0_i32_0 = arith.constant 0 : i32
    %c0_i32_1 = arith.constant 0 : i32
    return %c0_i32, %c0_i32_0 : i32, i32
  }
}

</mosaic_0001>

<llo_original>
// kernel: tpu_custom_call.1
$region0: #{tpu_custom_call.1}
  #allocation0 [shape = 'u32[]', space=smem, size = 0x4, offset = 0x4, fixed_abs, tag = 'smem constant byte address 0x4 - core index']
  #allocation1 [shape = 'u32[72,128]{1,0:T(1,128)}', space=vmem, size = 0x9000, scoped, tag = 'internal scratch']
  #allocation2 [shape = 'f32[8,8]{1,0:T(8,128)}', space=vmem, size = 0x1000, scoped, tag = 'scratch operand']
  #allocation3 [shape = 'f32[8,8]{1,0:T(8,128)}', space=vmem, size = 0x1000, scoped, tag = 'scratch operand']
  #allocation4 [shape = 'f32[1,8]{1,0:T(1,128)}', space=vmem, size = 0x200, scoped, tag = 'scratch operand']
  #allocation5 [shape = 'f32[1,8]{1,0:T(1,128)}', space=vmem, size = 0x200, scoped, tag = 'scratch operand']
  #allocation6 [shape = 'f32[1,8]{1,0:T(1,128)}', space=vmem, size = 0x200, scoped, tag = 'scratch operand']
  #allocation7 [shape = 'f32[2]{0:T(128)}', space=smem, size = 0x200, scoped, tag = 'scratch operand']
  %s0 = inlined_call_operand.vmem [shape: s32[8,1], index: 0, kind: input, shape index: {}]
  %s1 = inlined_call_operand.vmem [shape: s32[1,8], index: 1, kind: input, shape index: {}]
  %s2 = inlined_call_operand.vmem [shape: f32[8,32], index: 2, kind: input, shape index: {}]
  %s3 = inlined_call_operand.hbm [shape: f32[1,1], index: 3, kind: output, shape index: {}]
  %s4 = sld [smem:[#allocation0]]
  $region30: #{tpu_custom_call.1} parent=0
    _
  %s6 = ssub.s32 1, %s4
  %s7 = scalar_select 0, %s6, %s4
  $region1: #{tpu_custom_call.1} parent=0
    #allocation8 [shape = 'u8[512]{0}', space=smem, size = 0x200, scoped, tag = 'output window, operand 0, single buffered']
    #allocation9 [shape = 's32[1]{0}', space=sflag, size = 0x4, scoped, tag = 'scoped memory for tpu_custom_call.1']
    %8 = vsyncpa [#allocation9], 0
    // Predicated region
    $region2: #{tpu_custom_call.1} parent=1 // pred_check
      _
    $region3: #{tpu_custom_call.1} parent=1 // pred_check_branch
      %10 = sbr.rel (0) target = $region5
    $region4: #{tpu_custom_call.1} parent=1 // pred_region
      _
    $region5: #{tpu_custom_call.1} parent=1 // pred_fallthru
      _
    // Predicated region
    $region6: #{tpu_custom_call.1} parent=1 // pred_check
      _
    $region7: #{tpu_custom_call.1} parent=1 // pred_check_branch
      %12 = sbr.rel (0) target = $region9
    $region8: #{tpu_custom_call.1} parent=1 // pred_region
      _
    $region9: #{tpu_custom_call.1} parent=1 // pred_fallthru
      _
    // Predicated region
    $region10: #{tpu_custom_call.1} parent=1 // pred_check
      _
    $region11: #{tpu_custom_call.1} parent=1 // pred_check_branch
      %14 = sbr.rel (0) target = $region13
    $region12: #{tpu_custom_call.1} parent=1 // pred_region
      _
    $region13: #{tpu_custom_call.1} parent=1 // pred_fallthru
      _
    %p15 = scmp.eq.s32.totalorder 0, 0
    // Predicated region
    $region14: #{tpu_custom_call.1} parent=1 // pred_check
      %p16 = pneg %p15
    $region15: #{tpu_custom_call.1} parent=1 // pred_check_branch
      %18 = sbr.rel (%p16) target = $region17
    $region16: #{tpu_custom_call.1} parent=1 // pred_region
      %v19 = vld [vmem:[%s2] sm:$0xff]
      %v20 = vmul.f32 %v19, %v19
      %vm21 = vcmask 261120
      %v22 = vsel %vm21, %v20, 0.0
      %23 = vadd.xlane.f32.xlu0 %v22
      %v24 = vpop.xlane.xlu0 %23
      %v26 = vsel %vm21, %v19, 0
      %28 = vmatpush.xpose.msra.mxu0 0.0
      %29 = vmatpush.xpose.msra.mxu0 0.0
      %30 = vmatpush.xpose.msra.mxu0 0.0
      %31 = vmatpush.xpose.msra.mxu0 0.0
      %32 = vmatpush.xpose.msra.mxu0 0.0
      %33 = vmatpush.xpose.msra.mxu0 0.0
      %34 = vmatpush.xpose.msra.mxu0 0.0
      %35 = vmatpush.xpose.msra.mxu0 0.0
      %36 = vmatpush.xpose.msra.mxu0 0.0
      %37 = vmatpush.xpose.msra.mxu0 0.0
      %38 = vmatpush.xpose.msra.mxu0 0.0
      %39 = vmatpush.xpose.msra.mxu0 0.0
      %40 = vmatpush.xpose.msra.mxu0 0.0
      %41 = vmatpush.xpose.msra.mxu0 0.0
      %42 = vmatpush.xpose.msra.mxu0 0.0
      %43 = vmatpush.xpose.msra.mxu0 %v26
      %44 = vmatmul.f32.gmra.mxu0 %v26
      %v45 = vpop.f32.mrf.mxu0
      %v46 = vadd.f32 0.0, %v45
      %47 = vdwg.mxu0
      %48 = vxpose.xlu0.b32.start [1/16] %v24, 128
      %49 = vxpose.xlu0.b32.cont [2/16] 0.0, 128
      %50 = vxpose.xlu0.b32.cont [3/16] 0.0, 128
      %51 = vxpose.xlu0.b32.cont [4/16] 0.0, 128
      %52 = vxpose.xlu0.b32.cont [5/16] 0.0, 128
      %53 = vxpose.xlu0.b32.cont [6/16] 0.0, 128
      %54 = vxpose.xlu0.b32.cont [7/16] 0.0, 128
      %55 = vxpose.xlu0.b32.cont [8/16] 0.0, 128
      %56 = vxpose.xlu0.b32.cont [9/16] 0.0, 128
      %57 = vxpose.xlu0.b32.cont [10/16] 0.0, 128
      %58 = vxpose.xlu0.b32.cont [11/16] 0.0, 128
      %59 = vxpose.xlu0.b32.cont [12/16] 0.0, 128
      %60 = vxpose.xlu0.b32.cont [13/16] 0.0, 128
      %61 = vxpose.xlu0.b32.cont [14/16] 0.0, 128
      %62 = vxpose.xlu0.b32.cont [15/16] 0.0, 128
      %63 = vxpose.xlu0.b32.end [16/16] 0.0, 128
      %v64 = vpop.trf.xlu0
      %v65 = vpop.trf.xlu0
      %v66 = vpop.trf.xlu0
      %v67 = vpop.trf.xlu0
      %v68 = vpop.trf.xlu0
      %v69 = vpop.trf.xlu0
      %v70 = vpop.trf.xlu0
      %v71 = vpop.trf.xlu0
      %v72 = vpop.trf.xlu0
      %v73 = vpop.trf.xlu0
      %v74 = vpop.trf.xlu0
      %v75 = vpop.trf.xlu0
      %v76 = vpop.trf.xlu0
      %v77 = vpop.trf.xlu0
      %v78 = vpop.trf.xlu0
      %v79 = vpop.trf.xlu0
      %v80 = vperm.slane %v64, 0
      %v81 = vadd.f32 %v24, %v80
      %v82 = vmul.f32 %v46, 2.0
      %v83 = vsub.f32 %v81, %v82
      %v84 = vmax.f32 %v83, 0.0
      %v85 = vlaneseq
      %v86 = vshrl.u32 %v85, 7
      %v87 = vlaneseq
      %v88 = vand.u32 %v87, 127
      %vm89 = vcmp.eq.s32.totalorder %v86, %v88
      %v90 = vsel %vm89, 0.0, %v84
      %vm91 = vcmask 64512
      %92 = vst.msk [vmem:[#allocation2] sm:$0xff] %vm91, %v90
      %v93 = vld [vmem:[%s0] sm:$0xff]
      %v94 = vld [vmem:[%s1] sm:$0x1]
      %95 = vset.pattern.permute.xlu0 0
      %96 = vperm.xlu0 %95, %v93
      %v97 = vpop.permute.xlu0 %96
      %v98 = vperm.slane %v94, 0
      %vm99 = vcmp.ne.s32.totalorder %v97, %v98
      %vm100 = vcmp.lt.s32.totalorder %v86, 8
      %vm101 = vmand %vm99, %vm100
      %v102 = vsel %vm91, %v90, -inf
      %v103 = vrot.slane %v102, 4
      %v104 = vmax.f32 %v102, %v103
      %v105 = vrot.slane %v104, 2
      %v106 = vmax.f32 %v104, %v105
      %v107 = vrot.slane %v106, 1
      %v108 = vmax.f32 %v106, %v107
      %v109 = vsel %vm91, %v90, inf
      %v110 = vrot.slane %v109, 4
      %v111 = vmin.f32 %v109, %v110
      %v112 = vrot.slane %v111, 2
      %v113 = vmin.f32 %v111, %v112
      %v114 = vrot.slane %v113, 1
      %v115 = vmin.f32 %v113, %v114
      %vm116 = vcmask 57344
      %117 = vst.msk [vmem:[#allocation4] sm:$0x1] %vm116, %v108
      %v118 = vsel %vm101, %v90, 0.0
      %v119 = vsel %vm91, %v118, -inf
      %v120 = vrot.slane %v119, 4
      %v121 = vmax.f32 %v119, %v120
      %v122 = vrot.slane %v121, 2
      %v123 = vmax.f32 %v121, %v122
      %v124 = vrot.slane %v123, 1
      %v125 = vmax.f32 %v123, %v124
      %126 = vst.msk [vmem:[#allocation5] sm:$0x1] %vm116, %v125
      %v127 = vsub.f32 %v90, %v115
      %v128 = vsel %vm101, %v127, 0.0
      %v129 = vsel %vm91, %v128, -inf
      %v130 = vrot.slane %v129, 4
      %v131 = vmax.f32 %v129, %v130
      %v132 = vrot.slane %v131, 2
      %v133 = vmax.f32 %v131, %v132
      %v134 = vrot.slane %v133, 1
      %v135 = vmax.f32 %v133, %v134
      %v136 = vadd.f32 %v135, %v115
      %137 = vst.msk [vmem:[#allocation6] sm:$0x1] %vm116, %v136
      %vm138 = vcmp.lt.s32.totalorder %v88, 8
      %vm139 = vmand %vm99, %vm138
      %140 = vmax.xlane.f32.xlu0 %v102
      %v141 = vpop.xlane.xlu0 %140
      %v142 = vsub.f32 %v90, %v141
      %v143 = vsel %vm139, %v142, 0.0
      %144 = vst.msk [vmem:[#allocation3] sm:$0xff] %vm91, %v143
      %s145 = scalar_lea.smem [#allocation7], 0
      %146 = sst [smem:[%s145]] 0.0
      %s147 = scalar_lea.smem [#allocation7], 1
      %148 = sst [smem:[%s147]] 0.0
    $region17: #{tpu_custom_call.1} parent=1 // pred_fallthru
      _
    %s149 = smul.u32 0, 8
    %s150 = scalar_lea.vmem [#allocation2], %s149
    %v151 = vld [vmem:[%s150] sm:$0xff]
    %v152 = vld [vmem:[#allocation2] sm:$0xff]
    %v153 = vperm.slane %v151, 0
    %v154 = vlaneseq
    %v155 = vshrl.u32 %v154, 7
    %157 = vset.pattern.permute.xlu0 %v155
    %158 = vperm.xlu0 %157, %v153
    %v159 = vpop.permute.xlu0 %158
    %v160 = vperm.slane %v151, 1
    %v161 = vlaneseq
    %v162 = vshrl.u32 %v161, 7
    %164 = vset.pattern.permute.xlu0 %v162
    %165 = vperm.xlu0 %164, %v160
    %v166 = vpop.permute.xlu0 %165
    %v167 = vperm.slane %v151, 2
    %v168 = vlaneseq
    %v169 = vshrl.u32 %v168, 7
    %171 = vset.pattern.permute.xlu0 %v169
    %172 = vperm.xlu0 %171, %v167
    %v173 = vpop.permute.xlu0 %172
    %v174 = vperm.slane %v151, 3
    %v175 = vlaneseq
    %v176 = vshrl.u32 %v175, 7
    %178 = vset.pattern.permute.xlu0 %v176
    %179 = vperm.xlu0 %178, %v174
    %v180 = vpop.permute.xlu0 %179
    %v181 = vperm.slane %v151, 4
    %v182 = vlaneseq
    %v183 = vshrl.u32 %v182, 7
    %185 = vset.pattern.permute.xlu0 %v183
    %186 = vperm.xlu0 %185, %v181
    %v187 = vpop.permute.xlu0 %186
    %v188 = vperm.slane %v151, 5
    %v189 = vlaneseq
    %v190 = vshrl.u32 %v189, 7
    %192 = vset.pattern.permute.xlu0 %v190
    %193 = vperm.xlu0 %192, %v188
    %v194 = vpop.permute.xlu0 %193
    %v195 = vperm.slane %v151, 6
    %v196 = vlaneseq
    %v197 = vshrl.u32 %v196, 7
    %199 = vset.pattern.permute.xlu0 %v197
    %200 = vperm.xlu0 %199, %v195
    %v201 = vpop.permute.xlu0 %200
    %v202 = vperm.slane %v151, 7
    %v203 = vlaneseq
    %v204 = vshrl.u32 %v203, 7
    %206 = vset.pattern.permute.xlu0 %v204
    %207 = vperm.xlu0 %206, %v202
    %v208 = vpop.permute.xlu0 %207
    %vm209 = vcmp.gt.f32.partialorder %v152, %v159
    %vm210 = vcmp.gt.f32.partialorder %v152, %v166
    %vm211 = vcmp.gt.f32.partialorder %v152, %v173
    %vm212 = vcmp.gt.f32.partialorder %v152, %v180
    %vm213 = vcmp.gt.f32.partialorder %v152, %v187
    %vm214 = vcmp.gt.f32.partialorder %v152, %v194
    %vm215 = vcmp.gt.f32.partialorder %v152, %v201
    %vm216 = vcmp.gt.f32.partialorder %v152, %v208
    %v217 = vld [vmem:[#allocation3] sm:$0xff]
    %v218 = vsel %vm209, %v217, 0.0
    %v219 = vsel %vm210, %v217, 0.0
    %v220 = vsel %vm211, %v217, 0.0
    %v221 = vsel %vm212, %v217, 0.0
    %v222 = vsel %vm213, %v217, 0.0
    %v223 = vsel %vm214, %v217, 0.0
    %v224 = vsel %vm215, %v217, 0.0
    %v225 = vsel %vm216, %v217, 0.0
    %vm226 = vcmask 64512
    %v227 = vsel %vm226, %v218, inf
    %228 = vmin.xlane.f32.xlu0 %v227
    %v229 = vpop.xlane.xlu0 %228
    %v230 = vsel %vm226, %v219, inf
    %231 = vmin.xlane.f32.xlu0 %v230
    %v232 = vpop.xlane.xlu0 %231
    %v233 = vsel %vm226, %v220, inf
    %234 = vmin.xlane.f32.xlu0 %v233
    %v235 = vpop.xlane.xlu0 %234
    %v236 = vsel %vm226, %v221, inf
    %237 = vmin.xlane.f32.xlu0 %v236
    %v238 = vpop.xlane.xlu0 %237
    %v239 = vsel %vm226, %v222, inf
    %240 = vmin.xlane.f32.xlu0 %v239
    %v241 = vpop.xlane.xlu0 %240
    %v242 = vsel %vm226, %v223, inf
    %243 = vmin.xlane.f32.xlu0 %v242
    %v244 = vpop.xlane.xlu0 %243
    %v245 = vsel %vm226, %v224, inf
    %246 = vmin.xlane.f32.xlu0 %v245
    %v247 = vpop.xlane.xlu0 %246
    %v248 = vsel %vm226, %v225, inf
    %249 = vmin.xlane.f32.xlu0 %v248
    %v250 = vpop.xlane.xlu0 %249
    %v251 = vld [vmem:[#allocation4] sm:$0x1]
    %v253 = vperm.slane %v251, 0
    %v254 = vlaneseq
    %v255 = vshrl.u32 %v254, 7
    %257 = vset.pattern.permute.xlu0 %v255
    %258 = vperm.xlu0 %257, %v253
    %v259 = vpop.permute.xlu0 %258
    %v261 = vadd.f32 %v229, %v259
    %v262 = vadd.f32 %v232, %v259
    %v263 = vadd.f32 %v235, %v259
    %v264 = vadd.f32 %v238, %v259
    %v265 = vadd.f32 %v241, %v259
    %v266 = vadd.f32 %v244, %v259
    %v267 = vadd.f32 %v247, %v259
    %v268 = vadd.f32 %v250, %v259
    %v269 = vld [vmem:[#allocation5] sm:$0x1]
    %v271 = vperm.slane %v269, 0
    %vm273 = vcmp.gt.f32.partialorder %v271, %v151
    %v274 = vld [vmem:[#allocation6] sm:$0x1]
    %v276 = vperm.slane %v274, 0
    %286 = vset.pattern.permute.xlu0 0
    %287 = vperm.xlu0 %286, %v261
    %v288 = vpop.permute.xlu0 %287
    %289 = vset.pattern.permute.xlu0 0
    %290 = vperm.xlu0 %289, %v262
    %v291 = vpop.permute.xlu0 %290
    %292 = vset.pattern.permute.xlu0 0
    %293 = vperm.xlu0 %292, %v263
    %v294 = vpop.permute.xlu0 %293
    %295 = vset.pattern.permute.xlu0 0
    %296 = vperm.xlu0 %295, %v264
    %v297 = vpop.permute.xlu0 %296
    %298 = vset.pattern.permute.xlu0 0
    %299 = vperm.xlu0 %298, %v265
    %v300 = vpop.permute.xlu0 %299
    %301 = vset.pattern.permute.xlu0 0
    %302 = vperm.xlu0 %301, %v266
    %v303 = vpop.permute.xlu0 %302
    %304 = vset.pattern.permute.xlu0 0
    %305 = vperm.xlu0 %304, %v267
    %v306 = vpop.permute.xlu0 %305
    %307 = vset.pattern.permute.xlu0 0
    %308 = vperm.xlu0 %307, %v268
    %v309 = vpop.permute.xlu0 %308
    %v310 = vlaneseq
    %v311 = vand.u32 %v310, 127
    %v312 = vperm.slane %v288, %v311
    %v313 = vperm.slane %v291, %v311
    %v314 = vperm.slane %v294, %v311
    %v315 = vperm.slane %v297, %v311
    %v316 = vperm.slane %v300, %v311
    %v317 = vperm.slane %v303, %v311
    %v318 = vperm.slane %v306, %v311
    %v319 = vperm.slane %v309, %v311
    %vm320 = vcmask 1041409
    %v321 = vsel %vm320, %v313, %v312
    %vm322 = vcmask 1042434
    %v323 = vsel %vm322, %v314, %v321
    %vm324 = vcmask 1043459
    %v325 = vsel %vm324, %v315, %v323
    %vm326 = vcmask 1044484
    %v327 = vsel %vm326, %v316, %v325
    %vm328 = vcmask 1045509
    %v329 = vsel %vm328, %v317, %v327
    %vm330 = vcmask 1046534
    %v331 = vsel %vm330, %v318, %v329
    %vm332 = vcmask 1047559
    %v333 = vsel %vm332, %v319, %v331
    %v335 = vsel %vm273, %v333, %v276
    %v336 = vadd.f32 %v151, 1.0
    %v337 = vsub.f32 %v336, %v335
    %s338 = scalar_lea.vmem %s0, %s149
    %v339 = vld [vmem:[%s338] sm:$0xff]
    %v340 = vld [vmem:[%s1] sm:$0x1]
    %341 = vset.pattern.permute.xlu0 0
    %342 = vperm.xlu0 %341, %v339
    %v343 = vpop.permute.xlu0 %342
    %v344 = vperm.slane %v340, 0
    %vm345 = vcmp.eq.s32.totalorder %v343, %v344
    %v346 = vlaneseq
    %v347 = vshrl.u32 %v346, 7
    %v348 = vstv %s149
    %v349 = vadd.s32 %v347, %v348
    %vm350 = vcmp.ne.s32.totalorder %v349, %v311
    %vm351 = vmand %vm345, %vm350
    %vm352 = vcmp.lt.s32.totalorder %v349, 8
    %vm353 = vmand %vm351, %vm352
    %vm354 = vcmp.lt.s32.totalorder %v311, 8
    %vm355 = vmand %vm353, %vm354
    %s356 = sld [smem:[#allocation7]]
    %v357 = vmax.f32 %v337, 0.0
    %v358 = vsel %vm355, %v357, 0.0
    %v359 = vsel %vm226, %v358, 0.0
    %360 = vadd.xlane.f32.xlu0 %v359
    %v361 = vpop.xlane.xlu0 %360
    %v362 = vrot.slane %v361, 4
    %v363 = vadd.f32 %v361, %v362
    %v364 = vrot.slane %v363, 2
    %v365 = vadd.f32 %v363, %v364
    %v366 = vrot.slane %v365, 1
    %v367 = vadd.f32 %v365, %v366
    %s368 = vtos %v367
    %s369 = sadd.f32 %s356, %s368
    %s370 = scalar_lea.smem [#allocation7], 0
    %371 = sst [smem:[%s370]] %s369
    %s372 = sld [smem:[#allocation7 + $0x1]]
    %v373 = vsel %vm355, 1.0, 0.0
    %v374 = vsel %vm226, %v373, 0.0
    %375 = vadd.xlane.f32.xlu0 %v374
    %v376 = vpop.xlane.xlu0 %375
    %v377 = vrot.slane %v376, 4
    %v378 = vadd.f32 %v376, %v377
    %v379 = vrot.slane %v378, 2
    %v380 = vadd.f32 %v378, %v379
    %v381 = vrot.slane %v380, 1
    %v382 = vadd.f32 %v380, %v381
    %s383 = vtos %v382
    %s384 = sadd.f32 %s372, %s383
    %s385 = scalar_lea.smem [#allocation7], 1
    %386 = sst [smem:[%s385]] %s384
    // Predicated region
    $region18: #{tpu_custom_call.1} parent=1 // pred_check
      %p387 = pneg %p15
    $region19: #{tpu_custom_call.1} parent=1 // pred_check_branch
      %389 = sbr.rel (%p387) target = $region21
    $region20: #{tpu_custom_call.1} parent=1 // pred_region
      %s390 = sld [smem:[#allocation7]]
      %s391 = sld [smem:[#allocation7 + $0x1]]
      %v392 = vstv %s391
      %v393 = vrcp.pop %v392
      %v394 = vmul.f32 %v392, %v393
      %v395 = vsub.f32 1.0, %v394
      %v396 = vmul.f32 %v393, %v395
      %v397 = vadd.f32 %v393, %v396
      %vm398 = vweird.f32 %v392
      %vm399 = vweird.f32 %v393
      %vm400 = vmor %vm398, %vm399
      %v401 = vsel %vm400, %v393, %v397
      %v402 = vand.u32 2147483647, %v392
      %vm403 = vcmp.eq.f32.partialorder %v402, 8.507059e+37
      %v404 = vand.u32 %v392, 2147483648
      %v405 = vor.u32 1.1754944e-38, %v404
      %v406 = vsel %vm403, %v405, %v401
      %s407 = vtos %v406
      %s408 = smul.f32 %s390, %s407
      %s409 = scalar_lea.smem [#allocation8], 0
      %410 = sst [smem:[%s409]] %s408
    $region21: #{tpu_custom_call.1} parent=1 // pred_fallthru
      _
    // Predicated region
    $region22: #{tpu_custom_call.1} parent=1 // pred_check
      _
    $region23: #{tpu_custom_call.1} parent=1 // pred_check_branch
      %412 = sbr.rel (0) target = $region25
    $region24: #{tpu_custom_call.1} parent=1 // pred_region
      %414 = vsyncadd [#allocation9], 0
      %s416 = sshll.u32 %s3, 4
      %s417 = int_to_ptr.hbm [resolvable:$true] %s416
      %419 = dma.smem_to_hbm [#allocation8], 16, %s417, [#allocation9]
    $region25: #{tpu_custom_call.1} parent=1 // pred_fallthru
      _
    // Predicated region
    $region26: #{tpu_custom_call.1} parent=1 // pred_check
      _
    $region27: #{tpu_custom_call.1} parent=1 // pred_check_branch
      %421 = sbr.rel (0) target = $region29
    $region28: #{tpu_custom_call.1} parent=1 // pred_region
      %423 = dma.done [#allocation9], 16
    $region29: #{tpu_custom_call.1} parent=1 // pred_fallthru
      _
    %424 = sfence
    %425 = vsyncpa [#allocation9], 1

</llo_original>
